<compile_context>
chip_gen: v7x
topology: tpu7x:2x2x1
jax: 0.10.0
libtpu: 0.0.40
codegen_flags: <defaults>
</compile_context>

<pallas_src>
import jax
import jax.numpy as jnp
from jax.experimental import pallas as pl
from jax.experimental.pallas import tpu as pltpu


def _skipgram_tile_kernel(vc_ref, ut_ref, uo_ref, out_ref):
    # vc_ref/ut_ref: (TB, D); uo_ref: (TB, K, D); out_ref: (1, TB)
    vc = vc_ref[...].astype(jnp.float32)
    ut = ut_ref[...].astype(jnp.float32)
    uo = uo_ref[...].astype(jnp.float32)

    # Per-example dot products: VPU multiply + lane reduce (contraction width 1 per
    # example => no MXU).
    numerator = jnp.sum(ut * vc, axis=-1, keepdims=True)            # (TB, 1)
    # TODO(synk): for K >= ~64 accumulate the denominator over K with an unrolled
    # fori_loop instead of materializing the (TB, K, D) broadcast temp.
    denominator = jnp.sum(uo * vc[:, None, :], axis=-1)             # (TB, K)

    # Stable logsumexp over the K outside words.
    m = jnp.max(denominator, axis=-1, keepdims=True)                # (TB, 1)
    lse = m + jnp.log(jnp.sum(jnp.exp(denominator - m), axis=-1, keepdims=True))
    per_example = numerator - lse                                   # (TB, 1)

    # Lane-dense per-tile output block of per-example log-probs.
    out_ref[...] = per_example.reshape(1, -1)                       # (1, TB)


def _round_up(x, m):
    return ((x + m - 1) // m) * m


def skipgram_loss(emb_v, emb_u, center_word, target_word, outside_words, *, tile_b=128):
    """emb_v/emb_u: (vocab, D); center/target: (B, 1) int; outside: (B, K) int."""
    B, K = outside_words.shape
    _, D = emb_v.shape

    # Tile must be a multiple of 8 (sublane); small batches collapse to a single tile.
    tile_b = max(8, min((tile_b // 8) * 8, _round_up(B, 8)))
    num_tiles = pl.cdiv(B, tile_b)
    b_pad = num_tiles * tile_b
    pad = b_pad - B

    # Pad indices to a multiple of the tile (padded rows gather vocab row 0 and are
    # sliced away after the kernel).
    c = jnp.pad(center_word[:, 0].astype(jnp.int32), (0, pad))
    t = jnp.pad(target_word[:, 0].astype(jnp.int32), (0, pad))
    o = jnp.pad(outside_words.astype(jnp.int32), ((0, pad), (0, 0)))

    # XLA-side gather; contiguous activations then stream through BlockSpec pipelining.
    vc = jnp.take(emb_v, c, axis=0)                                  # (b_pad, D)
    ut = jnp.take(emb_u, t, axis=0)                                  # (b_pad, D)
    uo = jnp.take(emb_u, o.reshape(-1), axis=0).reshape(b_pad, K, D)  # (b_pad, K, D)

    out = pl.pallas_call(
        _skipgram_tile_kernel,
        out_shape=jax.ShapeDtypeStruct((num_tiles, tile_b), jnp.float32),
        grid_spec=pltpu.PrefetchScalarGridSpec(
            num_scalar_prefetch=0,
            grid=(num_tiles,),
            in_specs=[
                pl.BlockSpec((tile_b, D), lambda i: (i, 0)),
                pl.BlockSpec((tile_b, D), lambda i: (i, 0)),
                pl.BlockSpec((tile_b, K, D), lambda i: (i, 0, 0)),
            ],
            out_specs=pl.BlockSpec((1, tile_b), lambda i: (i, 0)),
        ),
        compiler_params=pltpu.CompilerParams(
            # Tiles are independent -> shard the batch axis across TensorCores (v7x).
            dimension_semantics=("parallel",),
        ),
    )(vc, ut, uo)

    # -mean over the true batch; padded rows are discarded here (tiny XLA reduction).
    per_example = out.reshape(-1)[:B]
    return -jnp.mean(per_example)


def _reference_loss(emb_v, emb_u, center_word, target_word, outside_words):
    # Direct transcription of the PyTorch forward (same op order).
    vc = emb_v[center_word[:, 0]]
    ut = emb_u[target_word[:, 0]]
    uo = emb_u[outside_words]
    numerator = jnp.sum(ut * vc, axis=-1, keepdims=True)
    denominator = jnp.einsum("bkd,bd->bk", uo, vc)
    denom_sum = jnp.sum(jnp.exp(denominator), axis=1, keepdims=True)
    return -jnp.mean(jnp.log(jnp.exp(numerator) / denom_sum))


def _run_case(key, vocab_size, vec_dim, B, K, tile_b):
    k_v, k_u, k_c, k_t, k_o = jax.random.split(key, 5)
    emb_v = jax.random.normal(k_v, (vocab_size, vec_dim), dtype=jnp.float32)
    xavier_bound = (6.0 / (vocab_size + vec_dim)) ** 0.5
    emb_u = jax.random.uniform(
        k_u, (vocab_size, vec_dim), dtype=jnp.float32,
        minval=-xavier_bound, maxval=xavier_bound)
    center_word = jax.random.randint(k_c, (B, 1), 0, vocab_size, dtype=jnp.int32)
    target_word = jax.random.randint(k_t, (B, 1), 0, vocab_size, dtype=jnp.int32)
    outside_words = jax.random.randint(k_o, (B, K), 0, vocab_size, dtype=jnp.int32)

    loss = jax.block_until_ready(
        skipgram_loss(emb_v, emb_u, center_word, target_word, outside_words, tile_b=tile_b))
    ref = jax.block_until_ready(
        _reference_loss(emb_v, emb_u, center_word, target_word, outside_words))
    assert jnp.isfinite(loss), "loss is not finite"
    assert jnp.allclose(loss, ref, rtol=1e-5, atol=1e-5), (loss, ref)


if __name__ == "__main__":
    key = jax.random.PRNGKey(0)
    k1, k2 = jax.random.split(key, 2)

    # Small case: B not a multiple of 8 exercises padding / single-tile path.
    _run_case(k1, vocab_size=64, vec_dim=128, B=30, K=8, tile_b=128)
    # Multi-tile case: several grid steps, non-128 D, odd K.
    _run_case(k2, vocab_size=256, vec_dim=256, B=200, K=5, tile_b=128)

    print("KERNEL_OK")
</pallas_src>

<mosaic_0001>
module attributes {stable_mosaic.version = 11 : i64} {
  func.func @_skipgram_tile_kernel(%arg0: i32, %arg1: memref<32x128xf32, #tpu.memory_space<vmem>>, %arg2: memref<32x128xf32, #tpu.memory_space<vmem>>, %arg3: memref<32x8x128xf32, #tpu.memory_space<vmem>>, %arg4: memref<1x32xf32, #tpu.memory_space<vmem>>) attributes {dimension_semantics = [#tpu.dimension_semantics<parallel>], iteration_bounds = array<i64: 1>, scalar_prefetch = 0 : i64, scratch_operands = 0 : i64, tpu.core_type = #tpu.core_type<tc>, window_params = [{transform_indices = @transform_0, window_bounds = array<i64: 32, 128>}, {transform_indices = @transform_1, window_bounds = array<i64: 32, 128>}, {transform_indices = @transform_2, window_bounds = array<i64: 32, 8, 128>}, {transform_indices = @transform_3, window_bounds = array<i64: 1, 32>}]} {
    %c0 = arith.constant 0 : index
    %c0_0 = arith.constant 0 : index
    %0 = vector.load %arg1[%c0, %c0_0] : memref<32x128xf32, #tpu.memory_space<vmem>>, vector<32x128xf32>
    %c0_1 = arith.constant 0 : index
    %c0_2 = arith.constant 0 : index
    %1 = vector.load %arg2[%c0_1, %c0_2] : memref<32x128xf32, #tpu.memory_space<vmem>>, vector<32x128xf32>
    %c0_3 = arith.constant 0 : index
    %c0_4 = arith.constant 0 : index
    %c0_5 = arith.constant 0 : index
    %2 = vector.load %arg3[%c0_3, %c0_4, %c0_5] : memref<32x8x128xf32, #tpu.memory_space<vmem>>, vector<32x8x128xf32>
    %3 = arith.mulf %1, %0 : vector<32x128xf32>
    %cst = arith.constant dense<0.000000e+00> : vector<32xf32>
    %4 = vector.multi_reduction <add>, %3, %cst [1] : vector<32x128xf32> to vector<32xf32>
    %5 = vector.shape_cast %4 : vector<32xf32> to vector<32x1xf32>
    %6 = vector.shape_cast %0 : vector<32x128xf32> to vector<32x1x128xf32>
    %7 = vector.broadcast %6 : vector<32x1x128xf32> to vector<32x8x128xf32>
    %8 = arith.mulf %2, %7 : vector<32x8x128xf32>
    %cst_6 = arith.constant dense<0.000000e+00> : vector<32x8xf32>
    %9 = vector.multi_reduction <add>, %8, %cst_6 [2] : vector<32x8x128xf32> to vector<32x8xf32>
    %cst_7 = arith.constant dense<0xFF800000> : vector<32xf32>
    %10 = vector.multi_reduction <maximumf>, %9, %cst_7 [1] : vector<32x8xf32> to vector<32xf32>
    %11 = vector.shape_cast %10 : vector<32xf32> to vector<32x1xf32>
    %12 = vector.broadcast %11 : vector<32x1xf32> to vector<32x8xf32>
    %13 = arith.subf %9, %12 : vector<32x8xf32>
    %14 = math.exp %13 : vector<32x8xf32>
    %cst_8 = arith.constant dense<0.000000e+00> : vector<32xf32>
    %15 = vector.multi_reduction <add>, %14, %cst_8 [1] : vector<32x8xf32> to vector<32xf32>
    %16 = vector.shape_cast %15 : vector<32xf32> to vector<32x1xf32>
    %17 = math.log %16 : vector<32x1xf32>
    %18 = arith.addf %11, %17 : vector<32x1xf32>
    %19 = arith.subf %5, %18 : vector<32x1xf32>
    %20 = vector.shape_cast %19 : vector<32x1xf32> to vector<1x32xf32>
    %c0_9 = arith.constant 0 : index
    %c0_10 = arith.constant 0 : index
    %21 = vector.load %arg4[%c0_9, %c0_10] : memref<1x32xf32, #tpu.memory_space<vmem>>, vector<1x32xf32>
    tpu.vector_store %arg4[%c0_9, %c0_10], %20 {strides = array<i32>} : memref<1x32xf32, #tpu.memory_space<vmem>>, vector<1x32xf32>,
    return
  }
  func.func @transform_0(%arg0: i32) -> (i32, i32) {
    %c0_i32 = arith.constant 0 : i32
    %c0_i32_0 = arith.constant 0 : i32
    return %arg0, %c0_i32 : i32, i32
  }
  func.func @transform_1(%arg0: i32) -> (i32, i32) {
    %c0_i32 = arith.constant 0 : i32
    %c0_i32_0 = arith.constant 0 : i32
    return %arg0, %c0_i32 : i32, i32
  }
  func.func @transform_2(%arg0: i32) -> (i32, i32, i32) {
    %c0_i32 = arith.constant 0 : i32
    %c0_i32_0 = arith.constant 0 : i32
    %c0_i32_1 = arith.constant 0 : i32
    return %arg0, %c0_i32, %c0_i32_0 : i32, i32, i32
  }
  func.func @transform_3(%arg0: i32) -> (i32, i32) {
    %c0_i32 = arith.constant 0 : i32
    %c0_i32_0 = arith.constant 0 : i32
    return %arg0, %c0_i32 : i32, i32
  }
}

</mosaic_0001>

<llo_original>
// kernel: tpu_custom_call.1
$region0: #{tpu_custom_call.1}
  #allocation0 [shape = 'u32[]', space=smem, size = 0x4, offset = 0x4, fixed_abs, tag = 'smem constant byte address 0x4 - core index']
  #allocation1 [shape = 'u32[144,128]{1,0:T(1,128)}', space=vmem, size = 0x12000, scoped, tag = 'internal scratch']
  %s0 = inlined_call_operand.hbm [shape: f32[32,128], index: 0, kind: input, shape index: {}]
  %s1 = inlined_call_operand.hbm [shape: f32[32,128], index: 1, kind: input, shape index: {}]
  %s2 = inlined_call_operand.hbm [shape: f32[32,8,128], index: 2, kind: input, shape index: {}]
  %s3 = inlined_call_operand.hbm [shape: f32[1,32], index: 3, kind: output, shape index: {}]
  %s4 = sld [smem:[#allocation0]]
  $region34: #{tpu_custom_call.1} parent=0
    _
  %s6 = ssub.s32 1, %s4
  %s7 = scalar_select 0, %s6, %s4
  $region1: #{tpu_custom_call.1} parent=0
    #allocation2 [shape = 'u8[16384]{0}', space=vmem, size = 0x4000, scoped, tag = 'input window, operand 0, single buffered']
    #allocation3 [shape = 's32[1]{0}', space=sflag, size = 0x4, scoped, tag = 'scoped memory for tpu_custom_call.1']
    #allocation4 [shape = 's32[1]{0}', space=sflag, size = 0x4, scoped, tag = 'scoped memory for tpu_custom_call.1']
    #allocation5 [shape = 'u8[16384]{0}', space=vmem, size = 0x4000, scoped, tag = 'input window, operand 1, single buffered']
    #allocation6 [shape = 's32[1]{0}', space=sflag, size = 0x4, scoped, tag = 'scoped memory for tpu_custom_call.1']
    #allocation7 [shape = 'u8[131072]{0}', space=vmem, size = 0x20000, scoped, tag = 'input window, operand 2, single buffered']
    #allocation8 [shape = 'u8[512]{0}', space=vmem, size = 0x400, scoped, tag = 'output window, operand 0, single buffered']
    %8 = vsyncpa [#allocation3], 0
    %9 = vsyncpa [#allocation6], 0
    %10 = vsyncpa [#allocation4], 0
    // Predicated region
    $region2: #{tpu_custom_call.1} parent=1 // pred_check
      _
    $region3: #{tpu_custom_call.1} parent=1 // pred_check_branch
      %12 = sbr.rel (0) target = $region5
    $region4: #{tpu_custom_call.1} parent=1 // pred_region
      %s14 = ssub.s32 512, 512
      %15 = vsyncadd [#allocation3], %s14
      %s16 = sshll.u32 [#allocation2], 4
      %s17 = int_to_ptr.vmem [resolvable:$true] %s16
      %22 = dma.hbm_to_vmem [thread:$0]  %s0, 512, %s17, [#allocation3], 128, 128, 8
    $region5: #{tpu_custom_call.1} parent=1 // pred_fallthru
      _
    // Predicated region
    $region6: #{tpu_custom_call.1} parent=1 // pred_check
      _
    $region7: #{tpu_custom_call.1} parent=1 // pred_check_branch
      %24 = sbr.rel (0) target = $region9
    $region8: #{tpu_custom_call.1} parent=1 // pred_region
      %s26 = ssub.s32 512, 512
      %27 = vsyncadd [#allocation6], %s26
      %s28 = sshll.u32 [#allocation5], 4
      %s29 = int_to_ptr.vmem [resolvable:$true] %s28
      %34 = dma.hbm_to_vmem [thread:$0]  %s1, 512, %s29, [#allocation6], 128, 128, 8
    $region9: #{tpu_custom_call.1} parent=1 // pred_fallthru
      _
    // Predicated region
    $region10: #{tpu_custom_call.1} parent=1 // pred_check
      _
    $region11: #{tpu_custom_call.1} parent=1 // pred_check_branch
      %36 = sbr.rel (0) target = $region13
    $region12: #{tpu_custom_call.1} parent=1 // pred_region
      %s38 = ssub.s32 4096, 4096
      %39 = vsyncadd [#allocation6], %s38
      %s40 = sshll.u32 [#allocation7], 4
      %s41 = int_to_ptr.vmem [resolvable:$true] %s40
      %46 = dma.hbm_to_vmem [thread:$0]  %s2, 4096, %s41, [#allocation6], 128, 128, 8
    $region13: #{tpu_custom_call.1} parent=1 // pred_fallthru
      _
    // Predicated region
    $region14: #{tpu_custom_call.1} parent=1 // pred_check
      _
    $region15: #{tpu_custom_call.1} parent=1 // pred_check_branch
      %48 = sbr.rel (0) target = $region17
    $region16: #{tpu_custom_call.1} parent=1 // pred_region
      %49 = dma.done [#allocation3], 512
    $region17: #{tpu_custom_call.1} parent=1 // pred_fallthru
      _
    // Predicated region
    $region18: #{tpu_custom_call.1} parent=1 // pred_check
      _
    $region19: #{tpu_custom_call.1} parent=1 // pred_check_branch
      %51 = sbr.rel (0) target = $region21
    $region20: #{tpu_custom_call.1} parent=1 // pred_region
      %52 = dma.done [#allocation6], 512
    $region21: #{tpu_custom_call.1} parent=1 // pred_fallthru
      _
    // Predicated region
    $region22: #{tpu_custom_call.1} parent=1 // pred_check
      _
    $region23: #{tpu_custom_call.1} parent=1 // pred_check_branch
      %54 = sbr.rel (0) target = $region25
    $region24: #{tpu_custom_call.1} parent=1 // pred_region
      %55 = dma.done [#allocation6], 4096
    $region25: #{tpu_custom_call.1} parent=1 // pred_fallthru
      _
    %v56 = vld [vmem:[#allocation2] sm:$0xff]
    %v57 = vld [vmem:[#allocation2 + $0x8] sm:$0xff]
    %v58 = vld [vmem:[#allocation2 + $0x10] sm:$0xff]
    %v59 = vld [vmem:[#allocation2 + $0x18] sm:$0xff]
    %v60 = vld [vmem:[#allocation5] sm:$0xff]
    %v61 = vld [vmem:[#allocation5 + $0x8] sm:$0xff]
    %v62 = vld [vmem:[#allocation5 + $0x10] sm:$0xff]
    %v63 = vld [vmem:[#allocation5 + $0x18] sm:$0xff]
    %v64 = vld [vmem:[#allocation7] sm:$0xff]
    %v65 = vld [vmem:[#allocation7 + $0x8] sm:$0xff]
    %v66 = vld [vmem:[#allocation7 + $0x10] sm:$0xff]
    %v67 = vld [vmem:[#allocation7 + $0x18] sm:$0xff]
    %v68 = vld [vmem:[#allocation7 + $0x20] sm:$0xff]
    %v69 = vld [vmem:[#allocation7 + $0x28] sm:$0xff]
    %v70 = vld [vmem:[#allocation7 + $0x30] sm:$0xff]
    %v71 = vld [vmem:[#allocation7 + $0x38] sm:$0xff]
    %v72 = vld [vmem:[#allocation7 + $0x40] sm:$0xff]
    %v73 = vld [vmem:[#allocation7 + $0x48] sm:$0xff]
    %v74 = vld [vmem:[#allocation7 + $0x50] sm:$0xff]
    %v75 = vld [vmem:[#allocation7 + $0x58] sm:$0xff]
    %v76 = vld [vmem:[#allocation7 + $0x60] sm:$0xff]
    %v77 = vld [vmem:[#allocation7 + $0x68] sm:$0xff]
    %v78 = vld [vmem:[#allocation7 + $0x70] sm:$0xff]
    %v79 = vld [vmem:[#allocation7 + $0x78] sm:$0xff]
    %v80 = vld [vmem:[#allocation7 + $0x80] sm:$0xff]
    %v81 = vld [vmem:[#allocation7 + $0x88] sm:$0xff]
    %v82 = vld [vmem:[#allocation7 + $0x90] sm:$0xff]
    %v83 = vld [vmem:[#allocation7 + $0x98] sm:$0xff]
    %v84 = vld [vmem:[#allocation7 + $0xa0] sm:$0xff]
    %v85 = vld [vmem:[#allocation7 + $0xa8] sm:$0xff]
    %v86 = vld [vmem:[#allocation7 + $0xb0] sm:$0xff]
    %v87 = vld [vmem:[#allocation7 + $0xb8] sm:$0xff]
    %v88 = vld [vmem:[#allocation7 + $0xc0] sm:$0xff]
    %v89 = vld [vmem:[#allocation7 + $0xc8] sm:$0xff]
    %v90 = vld [vmem:[#allocation7 + $0xd0] sm:$0xff]
    %v91 = vld [vmem:[#allocation7 + $0xd8] sm:$0xff]
    %v92 = vld [vmem:[#allocation7 + $0xe0] sm:$0xff]
    %v93 = vld [vmem:[#allocation7 + $0xe8] sm:$0xff]
    %v94 = vld [vmem:[#allocation7 + $0xf0] sm:$0xff]
    %v95 = vld [vmem:[#allocation7 + $0xf8] sm:$0xff]
    %v96 = vmul.f32 %v60, %v56
    %v97 = vmul.f32 %v61, %v57
    %v98 = vmul.f32 %v62, %v58
    %v99 = vmul.f32 %v63, %v59
    %100 = vadd.xlane.f32.xlu0 %v96
    %v101 = vpop.xlane.xlu0 %100
    %102 = vadd.xlane.f32.xlu0 %v97
    %v103 = vpop.xlane.xlu0 %102
    %104 = vadd.xlane.f32.xlu0 %v98
    %v105 = vpop.xlane.xlu0 %104
    %106 = vadd.xlane.f32.xlu0 %v99
    %v107 = vpop.xlane.xlu0 %106
    %v112 = vcombine.high %v56, %v56
    %v114 = vunpack.c.l.s4 1966171168
    %v115 = vunpack.c.0.s8 %v114
    %v116 = vlaneseq
    %v117 = vshrl.u32 %v116, 7
    %v118 = vsub.s32 %v115, %v117
    %v119 = vrot.slane %v56, %v118
    %v121 = vunpack.c.l.s4 1966171168
    %v122 = vunpack.c.0.s8 %v121
    %v123 = vlaneseq
    %v124 = vshrl.u32 %v123, 7
    %v125 = vsub.s32 %v122, %v124
    %v126 = vrot.slane %v112, %v125
    %v127 = vcombine.high %v119, %v119
    %v128 = vcombine.high %v126, %v126
    %v130 = vunpack.c.l.s4 1966171168
    %v131 = vunpack.c.0.s8 %v130
    %v132 = vlaneseq
    %v133 = vshrl.u32 %v132, 7
    %v134 = vsub.s32 %v131, %v133
    %v135 = vrot.slane %v119, %v134
    %v137 = vunpack.c.l.s4 1966171168
    %v138 = vunpack.c.0.s8 %v137
    %v139 = vlaneseq
    %v140 = vshrl.u32 %v139, 7
    %v141 = vsub.s32 %v138, %v140
    %v142 = vrot.slane %v126, %v141
    %v144 = vunpack.c.l.s4 1966171168
    %v145 = vunpack.c.0.s8 %v144
    %v146 = vlaneseq
    %v147 = vshrl.u32 %v146, 7
    %v148 = vsub.s32 %v145, %v147
    %v149 = vrot.slane %v127, %v148
    %v151 = vunpack.c.l.s4 1966171168
    %v152 = vunpack.c.0.s8 %v151
    %v153 = vlaneseq
    %v154 = vshrl.u32 %v153, 7
    %v155 = vsub.s32 %v152, %v154
    %v156 = vrot.slane %v128, %v155
    %v157 = vcombine.high %v135, %v135
    %v158 = vcombine.high %v142, %v142
    %v159 = vcombine.high %v149, %v149
    %v160 = vcombine.high %v156, %v156
    %v161 = vcombine.high %v57, %v57
    %v163 = vunpack.c.l.s4 1966171168
    %v164 = vunpack.c.0.s8 %v163
    %v165 = vlaneseq
    %v166 = vshrl.u32 %v165, 7
    %v167 = vsub.s32 %v164, %v166
    %v168 = vrot.slane %v57, %v167
    %v170 = vunpack.c.l.s4 1966171168
    %v171 = vunpack.c.0.s8 %v170
    %v172 = vlaneseq
    %v173 = vshrl.u32 %v172, 7
    %v174 = vsub.s32 %v171, %v173
    %v175 = vrot.slane %v161, %v174
    %v176 = vcombine.high %v168, %v168
    %v177 = vcombine.high %v175, %v175
    %v179 = vunpack.c.l.s4 1966171168
    %v180 = vunpack.c.0.s8 %v179
    %v181 = vlaneseq
    %v182 = vshrl.u32 %v181, 7
    %v183 = vsub.s32 %v180, %v182
    %v184 = vrot.slane %v168, %v183
    %v186 = vunpack.c.l.s4 1966171168
    %v187 = vunpack.c.0.s8 %v186
    %v188 = vlaneseq
    %v189 = vshrl.u32 %v188, 7
    %v190 = vsub.s32 %v187, %v189
    %v191 = vrot.slane %v175, %v190
    %v193 = vunpack.c.l.s4 1966171168
    %v194 = vunpack.c.0.s8 %v193
    %v195 = vlaneseq
    %v196 = vshrl.u32 %v195, 7
    %v197 = vsub.s32 %v194, %v196
    %v198 = vrot.slane %v176, %v197
    %v200 = vunpack.c.l.s4 1966171168
    %v201 = vunpack.c.0.s8 %v200
    %v202 = vlaneseq
    %v203 = vshrl.u32 %v202, 7
    %v204 = vsub.s32 %v201, %v203
    %v205 = vrot.slane %v177, %v204
    %v206 = vcombine.high %v184, %v184
    %v207 = vcombine.high %v191, %v191
    %v208 = vcombine.high %v198, %v198
    %v209 = vcombine.high %v205, %v205
    %v210 = vcombine.high %v58, %v58
    %v212 = vunpack.c.l.s4 1966171168
    %v213 = vunpack.c.0.s8 %v212
    %v214 = vlaneseq
    %v215 = vshrl.u32 %v214, 7
    %v216 = vsub.s32 %v213, %v215
    %v217 = vrot.slane %v58, %v216
    %v219 = vunpack.c.l.s4 1966171168
    %v220 = vunpack.c.0.s8 %v219
    %v221 = vlaneseq
    %v222 = vshrl.u32 %v221, 7
    %v223 = vsub.s32 %v220, %v222
    %v224 = vrot.slane %v210, %v223
    %v225 = vcombine.high %v217, %v217
    %v226 = vcombine.high %v224, %v224
    %v228 = vunpack.c.l.s4 1966171168
    %v229 = vunpack.c.0.s8 %v228
    %v230 = vlaneseq
    %v231 = vshrl.u32 %v230, 7
    %v232 = vsub.s32 %v229, %v231
    %v233 = vrot.slane %v217, %v232
    %v235 = vunpack.c.l.s4 1966171168
    %v236 = vunpack.c.0.s8 %v235
    %v237 = vlaneseq
    %v238 = vshrl.u32 %v237, 7
    %v239 = vsub.s32 %v236, %v238
    %v240 = vrot.slane %v224, %v239
    %v242 = vunpack.c.l.s4 1966171168
    %v243 = vunpack.c.0.s8 %v242
    %v244 = vlaneseq
    %v245 = vshrl.u32 %v244, 7
    %v246 = vsub.s32 %v243, %v245
    %v247 = vrot.slane %v225, %v246
    %v249 = vunpack.c.l.s4 1966171168
    %v250 = vunpack.c.0.s8 %v249
    %v251 = vlaneseq
    %v252 = vshrl.u32 %v251, 7
    %v253 = vsub.s32 %v250, %v252
    %v254 = vrot.slane %v226, %v253
    %v255 = vcombine.high %v233, %v233
    %v256 = vcombine.high %v240, %v240
    %v257 = vcombine.high %v247, %v247
    %v258 = vcombine.high %v254, %v254
    %v259 = vcombine.high %v59, %v59
    %v261 = vunpack.c.l.s4 1966171168
    %v262 = vunpack.c.0.s8 %v261
    %v263 = vlaneseq
    %v264 = vshrl.u32 %v263, 7
    %v265 = vsub.s32 %v262, %v264
    %v266 = vrot.slane %v59, %v265
    %v268 = vunpack.c.l.s4 1966171168
    %v269 = vunpack.c.0.s8 %v268
    %v270 = vlaneseq
    %v271 = vshrl.u32 %v270, 7
    %v272 = vsub.s32 %v269, %v271
    %v273 = vrot.slane %v259, %v272
    %v274 = vcombine.high %v266, %v266
    %v275 = vcombine.high %v273, %v273
    %v277 = vunpack.c.l.s4 1966171168
    %v278 = vunpack.c.0.s8 %v277
    %v279 = vlaneseq
    %v280 = vshrl.u32 %v279, 7
    %v281 = vsub.s32 %v278, %v280
    %v282 = vrot.slane %v266, %v281
    %v284 = vunpack.c.l.s4 1966171168
    %v285 = vunpack.c.0.s8 %v284
    %v286 = vlaneseq
    %v287 = vshrl.u32 %v286, 7
    %v288 = vsub.s32 %v285, %v287
    %v289 = vrot.slane %v273, %v288
    %v291 = vunpack.c.l.s4 1966171168
    %v292 = vunpack.c.0.s8 %v291
    %v293 = vlaneseq
    %v294 = vshrl.u32 %v293, 7
    %v295 = vsub.s32 %v292, %v294
    %v296 = vrot.slane %v274, %v295
    %v298 = vunpack.c.l.s4 1966171168
    %v299 = vunpack.c.0.s8 %v298
    %v300 = vlaneseq
    %v301 = vshrl.u32 %v300, 7
    %v302 = vsub.s32 %v299, %v301
    %v303 = vrot.slane %v275, %v302
    %v304 = vcombine.high %v282, %v282
    %v305 = vcombine.high %v289, %v289
    %v306 = vcombine.high %v296, %v296
    %v307 = vcombine.high %v303, %v303
    %v308 = vlaneseq
    %v309 = vshrl.u32 %v308, 7
    %v310 = vsub.s32 0, %v309
    %v311 = vrot.slane %v135, %v310
    %v312 = vlaneseq
    %v313 = vshrl.u32 %v312, 7
    %v314 = vsub.s32 0, %v313
    %v315 = vrot.slane %v149, %v314
    %v316 = vlaneseq
    %v317 = vshrl.u32 %v316, 7
    %v318 = vsub.s32 0, %v317
    %v319 = vrot.slane %v157, %v318
    %v320 = vlaneseq
    %v321 = vshrl.u32 %v320, 7
    %v322 = vsub.s32 0, %v321
    %v323 = vrot.slane %v159, %v322
    %v324 = vlaneseq
    %v325 = vshrl.u32 %v324, 7
    %v326 = vsub.s32 0, %v325
    %v327 = vrot.slane %v142, %v326
    %v328 = vlaneseq
    %v329 = vshrl.u32 %v328, 7
    %v330 = vsub.s32 0, %v329
    %v331 = vrot.slane %v156, %v330
    %v332 = vlaneseq
    %v333 = vshrl.u32 %v332, 7
    %v334 = vsub.s32 0, %v333
    %v335 = vrot.slane %v158, %v334
    %v336 = vlaneseq
    %v337 = vshrl.u32 %v336, 7
    %v338 = vsub.s32 0, %v337
    %v339 = vrot.slane %v160, %v338
    %v340 = vlaneseq
    %v341 = vshrl.u32 %v340, 7
    %v342 = vsub.s32 0, %v341
    %v343 = vrot.slane %v184, %v342
    %v344 = vlaneseq
    %v345 = vshrl.u32 %v344, 7
    %v346 = vsub.s32 0, %v345
    %v347 = vrot.slane %v198, %v346
    %v348 = vlaneseq
    %v349 = vshrl.u32 %v348, 7
    %v350 = vsub.s32 0, %v349
    %v351 = vrot.slane %v206, %v350
    %v352 = vlaneseq
    %v353 = vshrl.u32 %v352, 7
    %v354 = vsub.s32 0, %v353
    %v355 = vrot.slane %v208, %v354
    %v356 = vlaneseq
    %v357 = vshrl.u32 %v356, 7
    %v358 = vsub.s32 0, %v357
    %v359 = vrot.slane %v191, %v358
    %v360 = vlaneseq
    %v361 = vshrl.u32 %v360, 7
    %v362 = vsub.s32 0, %v361
    %v363 = vrot.slane %v205, %v362
    %v364 = vlaneseq
    %v365 = vshrl.u32 %v364, 7
    %v366 = vsub.s32 0, %v365
    %v367 = vrot.slane %v207, %v366
    %v368 = vlaneseq
    %v369 = vshrl.u32 %v368, 7
    %v370 = vsub.s32 0, %v369
    %v371 = vrot.slane %v209, %v370
    %v372 = vlaneseq
    %v373 = vshrl.u32 %v372, 7
    %v374 = vsub.s32 0, %v373
    %v375 = vrot.slane %v233, %v374
    %v376 = vlaneseq
    %v377 = vshrl.u32 %v376, 7
    %v378 = vsub.s32 0, %v377
    %v379 = vrot.slane %v247, %v378
    %v380 = vlaneseq
    %v381 = vshrl.u32 %v380, 7
    %v382 = vsub.s32 0, %v381
    %v383 = vrot.slane %v255, %v382
    %v384 = vlaneseq
    %v385 = vshrl.u32 %v384, 7
    %v386 = vsub.s32 0, %v385
    %v387 = vrot.slane %v257, %v386
    %v388 = vlaneseq
    %v389 = vshrl.u32 %v388, 7
    %v390 = vsub.s32 0, %v389
    %v391 = vrot.slane %v240, %v390
    %v392 = vlaneseq
    %v393 = vshrl.u32 %v392, 7
    %v394 = vsub.s32 0, %v393
    %v395 = vrot.slane %v254, %v394
    %v396 = vlaneseq
    %v397 = vshrl.u32 %v396, 7
    %v398 = vsub.s32 0, %v397
    %v399 = vrot.slane %v256, %v398
    %v400 = vlaneseq
    %v401 = vshrl.u32 %v400, 7
    %v402 = vsub.s32 0, %v401
    %v403 = vrot.slane %v258, %v402
    %v404 = vlaneseq
    %v405 = vshrl.u32 %v404, 7
    %v406 = vsub.s32 0, %v405
    %v407 = vrot.slane %v282, %v406
    %v408 = vlaneseq
    %v409 = vshrl.u32 %v408, 7
    %v410 = vsub.s32 0, %v409
    %v411 = vrot.slane %v296, %v410
    %v412 = vlaneseq
    %v413 = vshrl.u32 %v412, 7
    %v414 = vsub.s32 0, %v413
    %v415 = vrot.slane %v304, %v414
    %v416 = vlaneseq
    %v417 = vshrl.u32 %v416, 7
    %v418 = vsub.s32 0, %v417
    %v419 = vrot.slane %v306, %v418
    %v420 = vlaneseq
    %v421 = vshrl.u32 %v420, 7
    %v422 = vsub.s32 0, %v421
    %v423 = vrot.slane %v289, %v422
    %v424 = vlaneseq
    %v425 = vshrl.u32 %v424, 7
    %v426 = vsub.s32 0, %v425
    %v427 = vrot.slane %v303, %v426
    %v428 = vlaneseq
    %v429 = vshrl.u32 %v428, 7
    %v430 = vsub.s32 0, %v429
    %v431 = vrot.slane %v305, %v430
    %v432 = vlaneseq
    %v433 = vshrl.u32 %v432, 7
    %v434 = vsub.s32 0, %v433
    %v435 = vrot.slane %v307, %v434
    %v468 = vmul.f32 %v64, %v311
    %v469 = vmul.f32 %v65, %v315
    %v470 = vmul.f32 %v66, %v319
    %v471 = vmul.f32 %v67, %v323
    %v472 = vmul.f32 %v68, %v327
    %v473 = vmul.f32 %v69, %v331
    %v474 = vmul.f32 %v70, %v335
    %v475 = vmul.f32 %v71, %v339
    %v476 = vmul.f32 %v72, %v343
    %v477 = vmul.f32 %v73, %v347
    %v478 = vmul.f32 %v74, %v351
    %v479 = vmul.f32 %v75, %v355
    %v480 = vmul.f32 %v76, %v359
    %v481 = vmul.f32 %v77, %v363
    %v482 = vmul.f32 %v78, %v367
    %v483 = vmul.f32 %v79, %v371
    %v484 = vmul.f32 %v80, %v375
    %v485 = vmul.f32 %v81, %v379
    %v486 = vmul.f32 %v82, %v383
    %v487 = vmul.f32 %v83, %v387
    %v488 = vmul.f32 %v84, %v391
    %v489 = vmul.f32 %v85, %v395
    %v490 = vmul.f32 %v86, %v399
    %v491 = vmul.f32 %v87, %v403
    %v492 = vmul.f32 %v88, %v407
    %v493 = vmul.f32 %v89, %v411
    %v494 = vmul.f32 %v90, %v415
    %v495 = vmul.f32 %v91, %v419
    %v496 = vmul.f32 %v92, %v423
    %v497 = vmul.f32 %v93, %v427
    %v498 = vmul.f32 %v94, %v431
    %v499 = vmul.f32 %v95, %v435
    %500 = vadd.xlane.f32.xlu0 %v468
    %v501 = vpop.xlane.xlu0 %500
    %502 = vadd.xlane.f32.xlu0 %v469
    %v503 = vpop.xlane.xlu0 %502
    %504 = vadd.xlane.f32.xlu0 %v470
    %v505 = vpop.xlane.xlu0 %504
    %506 = vadd.xlane.f32.xlu0 %v471
    %v507 = vpop.xlane.xlu0 %506
    %508 = vadd.xlane.f32.xlu0 %v472
    %v509 = vpop.xlane.xlu0 %508
    %510 = vadd.xlane.f32.xlu0 %v473
    %v511 = vpop.xlane.xlu0 %510
    %512 = vadd.xlane.f32.xlu0 %v474
    %v513 = vpop.xlane.xlu0 %512
    %514 = vadd.xlane.f32.xlu0 %v475
    %v515 = vpop.xlane.xlu0 %514
    %516 = vadd.xlane.f32.xlu0 %v476
    %v517 = vpop.xlane.xlu0 %516
    %518 = vadd.xlane.f32.xlu0 %v477
    %v519 = vpop.xlane.xlu0 %518
    %520 = vadd.xlane.f32.xlu0 %v478
    %v521 = vpop.xlane.xlu0 %520
    %522 = vadd.xlane.f32.xlu0 %v479
    %v523 = vpop.xlane.xlu0 %522
    %524 = vadd.xlane.f32.xlu0 %v480
    %v525 = vpop.xlane.xlu0 %524
    %526 = vadd.xlane.f32.xlu0 %v481
    %v527 = vpop.xlane.xlu0 %526
    %528 = vadd.xlane.f32.xlu0 %v482
    %v529 = vpop.xlane.xlu0 %528
    %530 = vadd.xlane.f32.xlu0 %v483
    %v531 = vpop.xlane.xlu0 %530
    %532 = vadd.xlane.f32.xlu0 %v484
    %v533 = vpop.xlane.xlu0 %532
    %534 = vadd.xlane.f32.xlu0 %v485
    %v535 = vpop.xlane.xlu0 %534
    %536 = vadd.xlane.f32.xlu0 %v486
    %v537 = vpop.xlane.xlu0 %536
    %538 = vadd.xlane.f32.xlu0 %v487
    %v539 = vpop.xlane.xlu0 %538
    %540 = vadd.xlane.f32.xlu0 %v488
    %v541 = vpop.xlane.xlu0 %540
    %542 = vadd.xlane.f32.xlu0 %v489
    %v543 = vpop.xlane.xlu0 %542
    %544 = vadd.xlane.f32.xlu0 %v490
    %v545 = vpop.xlane.xlu0 %544
    %546 = vadd.xlane.f32.xlu0 %v491
    %v547 = vpop.xlane.xlu0 %546
    %548 = vadd.xlane.f32.xlu0 %v492
    %v549 = vpop.xlane.xlu0 %548
    %550 = vadd.xlane.f32.xlu0 %v493
    %v551 = vpop.xlane.xlu0 %550
    %552 = vadd.xlane.f32.xlu0 %v494
    %v553 = vpop.xlane.xlu0 %552
    %554 = vadd.xlane.f32.xlu0 %v495
    %v555 = vpop.xlane.xlu0 %554
    %556 = vadd.xlane.f32.xlu0 %v496
    %v557 = vpop.xlane.xlu0 %556
    %558 = vadd.xlane.f32.xlu0 %v497
    %v559 = vpop.xlane.xlu0 %558
    %560 = vadd.xlane.f32.xlu0 %v498
    %v561 = vpop.xlane.xlu0 %560
    %562 = vadd.xlane.f32.xlu0 %v499
    %v563 = vpop.xlane.xlu0 %562
    %v596 = vlaneseq
    %v597 = vand.u32 %v596, 127
    %v598 = vlaneseq
    %v599 = vshrl.u32 %v598, 7
    %v600 = vsub.s32 %v597, %v599
    %v601 = vrot.slane %v501, %v600
    %v602 = vlaneseq
    %v603 = vshrl.u32 %v602, 7
    %v604 = vsub.s32 %v597, %v603
    %v605 = vrot.slane %v503, %v604
    %v606 = vlaneseq
    %v607 = vshrl.u32 %v606, 7
    %v608 = vsub.s32 %v597, %v607
    %v609 = vrot.slane %v505, %v608
    %v610 = vlaneseq
    %v611 = vshrl.u32 %v610, 7
    %v612 = vsub.s32 %v597, %v611
    %v613 = vrot.slane %v507, %v612
    %v614 = vlaneseq
    %v615 = vshrl.u32 %v614, 7
    %v616 = vsub.s32 %v597, %v615
    %v617 = vrot.slane %v509, %v616
    %v618 = vlaneseq
    %v619 = vshrl.u32 %v618, 7
    %v620 = vsub.s32 %v597, %v619
    %v621 = vrot.slane %v511, %v620
    %v622 = vlaneseq
    %v623 = vshrl.u32 %v622, 7
    %v624 = vsub.s32 %v597, %v623
    %v625 = vrot.slane %v513, %v624
    %v626 = vlaneseq
    %v627 = vshrl.u32 %v626, 7
    %v628 = vsub.s32 %v597, %v627
    %v629 = vrot.slane %v515, %v628
    %v630 = vlaneseq
    %v631 = vshrl.u32 %v630, 7
    %v632 = vsub.s32 %v597, %v631
    %v633 = vrot.slane %v517, %v632
    %v634 = vlaneseq
    %v635 = vshrl.u32 %v634, 7
    %v636 = vsub.s32 %v597, %v635
    %v637 = vrot.slane %v519, %v636
    %v638 = vlaneseq
    %v639 = vshrl.u32 %v638, 7
    %v640 = vsub.s32 %v597, %v639
    %v641 = vrot.slane %v521, %v640
    %v642 = vlaneseq
    %v643 = vshrl.u32 %v642, 7
    %v644 = vsub.s32 %v597, %v643
    %v645 = vrot.slane %v523, %v644
    %v646 = vlaneseq
    %v647 = vshrl.u32 %v646, 7
    %v648 = vsub.s32 %v597, %v647
    %v649 = vrot.slane %v525, %v648
    %v650 = vlaneseq
    %v651 = vshrl.u32 %v650, 7
    %v652 = vsub.s32 %v597, %v651
    %v653 = vrot.slane %v527, %v652
    %v654 = vlaneseq
    %v655 = vshrl.u32 %v654, 7
    %v656 = vsub.s32 %v597, %v655
    %v657 = vrot.slane %v529, %v656
    %v658 = vlaneseq
    %v659 = vshrl.u32 %v658, 7
    %v660 = vsub.s32 %v597, %v659
    %v661 = vrot.slane %v531, %v660
    %v662 = vlaneseq
    %v663 = vshrl.u32 %v662, 7
    %v664 = vsub.s32 %v597, %v663
    %v665 = vrot.slane %v533, %v664
    %v666 = vlaneseq
    %v667 = vshrl.u32 %v666, 7
    %v668 = vsub.s32 %v597, %v667
    %v669 = vrot.slane %v535, %v668
    %v670 = vlaneseq
    %v671 = vshrl.u32 %v670, 7
    %v672 = vsub.s32 %v597, %v671
    %v673 = vrot.slane %v537, %v672
    %v674 = vlaneseq
    %v675 = vshrl.u32 %v674, 7
    %v676 = vsub.s32 %v597, %v675
    %v677 = vrot.slane %v539, %v676
    %v678 = vlaneseq
    %v679 = vshrl.u32 %v678, 7
    %v680 = vsub.s32 %v597, %v679
    %v681 = vrot.slane %v541, %v680
    %v682 = vlaneseq
    %v683 = vshrl.u32 %v682, 7
    %v684 = vsub.s32 %v597, %v683
    %v685 = vrot.slane %v543, %v684
    %v686 = vlaneseq
    %v687 = vshrl.u32 %v686, 7
    %v688 = vsub.s32 %v597, %v687
    %v689 = vrot.slane %v545, %v688
    %v690 = vlaneseq
    %v691 = vshrl.u32 %v690, 7
    %v692 = vsub.s32 %v597, %v691
    %v693 = vrot.slane %v547, %v692
    %v694 = vlaneseq
    %v695 = vshrl.u32 %v694, 7
    %v696 = vsub.s32 %v597, %v695
    %v697 = vrot.slane %v549, %v696
    %v698 = vlaneseq
    %v699 = vshrl.u32 %v698, 7
    %v700 = vsub.s32 %v597, %v699
    %v701 = vrot.slane %v551, %v700
    %v702 = vlaneseq
    %v703 = vshrl.u32 %v702, 7
    %v704 = vsub.s32 %v597, %v703
    %v705 = vrot.slane %v553, %v704
    %v706 = vlaneseq
    %v707 = vshrl.u32 %v706, 7
    %v708 = vsub.s32 %v597, %v707
    %v709 = vrot.slane %v555, %v708
    %v710 = vlaneseq
    %v711 = vshrl.u32 %v710, 7
    %v712 = vsub.s32 %v597, %v711
    %v713 = vrot.slane %v557, %v712
    %v714 = vlaneseq
    %v715 = vshrl.u32 %v714, 7
    %v716 = vsub.s32 %v597, %v715
    %v717 = vrot.slane %v559, %v716
    %v718 = vlaneseq
    %v719 = vshrl.u32 %v718, 7
    %v720 = vsub.s32 %v597, %v719
    %v721 = vrot.slane %v561, %v720
    %v722 = vlaneseq
    %v723 = vshrl.u32 %v722, 7
    %v724 = vsub.s32 %v597, %v723
    %v725 = vrot.slane %v563, %v724
    %vm726 = vcmask 1041409
    %v727 = vsel %vm726, %v605, %v601
    %vm728 = vcmask 1042434
    %v729 = vsel %vm728, %v609, %v727
    %vm730 = vcmask 1043459
    %v731 = vsel %vm730, %v613, %v729
    %vm732 = vcmask 1044484
    %v733 = vsel %vm732, %v617, %v731
    %vm734 = vcmask 1045509
    %v735 = vsel %vm734, %v621, %v733
    %vm736 = vcmask 1046534
    %v737 = vsel %vm736, %v625, %v735
    %vm738 = vcmask 1047559
    %v739 = vsel %vm738, %v629, %v737
    %v740 = vsel %vm726, %v637, %v633
    %v741 = vsel %vm728, %v641, %v740
    %v742 = vsel %vm730, %v645, %v741
    %v743 = vsel %vm732, %v649, %v742
    %v744 = vsel %vm734, %v653, %v743
    %v745 = vsel %vm736, %v657, %v744
    %v746 = vsel %vm738, %v661, %v745
    %v747 = vsel %vm726, %v669, %v665
    %v748 = vsel %vm728, %v673, %v747
    %v749 = vsel %vm730, %v677, %v748
    %v750 = vsel %vm732, %v681, %v749
    %v751 = vsel %vm734, %v685, %v750
    %v752 = vsel %vm736, %v689, %v751
    %v753 = vsel %vm738, %v693, %v752
    %v754 = vsel %vm726, %v701, %v697
    %v755 = vsel %vm728, %v705, %v754
    %v756 = vsel %vm730, %v709, %v755
    %v757 = vsel %vm732, %v713, %v756
    %v758 = vsel %vm734, %v717, %v757
    %v759 = vsel %vm736, %v721, %v758
    %v760 = vsel %vm738, %v725, %v759
    %vm765 = vcmask 64512
    %v766 = vsel %vm765, %v739, -inf
    %767 = vmax.xlane.f32.xlu0 %v766
    %v768 = vpop.xlane.xlu0 %767
    %v769 = vsel %vm765, %v746, -inf
    %770 = vmax.xlane.f32.xlu0 %v769
    %v771 = vpop.xlane.xlu0 %770
    %v772 = vsel %vm765, %v753, -inf
    %773 = vmax.xlane.f32.xlu0 %v772
    %v774 = vpop.xlane.xlu0 %773
    %v775 = vsel %vm765, %v760, -inf
    %776 = vmax.xlane.f32.xlu0 %v775
    %v777 = vpop.xlane.xlu0 %776
    %v782 = vlaneseq
    %v783 = vshrl.u32 %v782, 7
    %v784 = vsub.s32 0, %v783
    %v785 = vrot.slane %v768, %v784
    %v786 = vlaneseq
    %v787 = vshrl.u32 %v786, 7
    %v788 = vsub.s32 1, %v787
    %v789 = vrot.slane %v768, %v788
    %v790 = vlaneseq
    %v791 = vshrl.u32 %v790, 7
    %v792 = vsub.s32 2, %v791
    %v793 = vrot.slane %v768, %v792
    %v794 = vlaneseq
    %v795 = vshrl.u32 %v794, 7
    %v796 = vsub.s32 3, %v795
    %v797 = vrot.slane %v768, %v796
    %v798 = vlaneseq
    %v799 = vshrl.u32 %v798, 7
    %v800 = vsub.s32 4, %v799
    %v801 = vrot.slane %v768, %v800
    %v802 = vlaneseq
    %v803 = vshrl.u32 %v802, 7
    %v804 = vsub.s32 5, %v803
    %v805 = vrot.slane %v768, %v804
    %v806 = vlaneseq
    %v807 = vshrl.u32 %v806, 7
    %v808 = vsub.s32 6, %v807
    %v809 = vrot.slane %v768, %v808
    %v810 = vlaneseq
    %v811 = vshrl.u32 %v810, 7
    %v812 = vsub.s32 7, %v811
    %v813 = vrot.slane %v768, %v812
    %v814 = vlaneseq
    %v815 = vshrl.u32 %v814, 7
    %v816 = vsub.s32 0, %v815
    %v817 = vrot.slane %v771, %v816
    %v818 = vlaneseq
    %v819 = vshrl.u32 %v818, 7
    %v820 = vsub.s32 1, %v819
    %v821 = vrot.slane %v771, %v820
    %v822 = vlaneseq
    %v823 = vshrl.u32 %v822, 7
    %v824 = vsub.s32 2, %v823
    %v825 = vrot.slane %v771, %v824
    %v826 = vlaneseq
    %v827 = vshrl.u32 %v826, 7
    %v828 = vsub.s32 3, %v827
    %v829 = vrot.slane %v771, %v828
    %v830 = vlaneseq
    %v831 = vshrl.u32 %v830, 7
    %v832 = vsub.s32 4, %v831
    %v833 = vrot.slane %v771, %v832
    %v834 = vlaneseq
    %v835 = vshrl.u32 %v834, 7
    %v836 = vsub.s32 5, %v835
    %v837 = vrot.slane %v771, %v836
    %v838 = vlaneseq
    %v839 = vshrl.u32 %v838, 7
    %v840 = vsub.s32 6, %v839
    %v841 = vrot.slane %v771, %v840
    %v842 = vlaneseq
    %v843 = vshrl.u32 %v842, 7
    %v844 = vsub.s32 7, %v843
    %v845 = vrot.slane %v771, %v844
    %v846 = vlaneseq
    %v847 = vshrl.u32 %v846, 7
    %v848 = vsub.s32 0, %v847
    %v849 = vrot.slane %v774, %v848
    %v850 = vlaneseq
    %v851 = vshrl.u32 %v850, 7
    %v852 = vsub.s32 1, %v851
    %v853 = vrot.slane %v774, %v852
    %v854 = vlaneseq
    %v855 = vshrl.u32 %v854, 7
    %v856 = vsub.s32 2, %v855
    %v857 = vrot.slane %v774, %v856
    %v858 = vlaneseq
    %v859 = vshrl.u32 %v858, 7
    %v860 = vsub.s32 3, %v859
    %v861 = vrot.slane %v774, %v860
    %v862 = vlaneseq
    %v863 = vshrl.u32 %v862, 7
    %v864 = vsub.s32 4, %v863
    %v865 = vrot.slane %v774, %v864
    %v866 = vlaneseq
    %v867 = vshrl.u32 %v866, 7
    %v868 = vsub.s32 5, %v867
    %v869 = vrot.slane %v774, %v868
    %v870 = vlaneseq
    %v871 = vshrl.u32 %v870, 7
    %v872 = vsub.s32 6, %v871
    %v873 = vrot.slane %v774, %v872
    %v874 = vlaneseq
    %v875 = vshrl.u32 %v874, 7
    %v876 = vsub.s32 7, %v875
    %v877 = vrot.slane %v774, %v876
    %v878 = vlaneseq
    %v879 = vshrl.u32 %v878, 7
    %v880 = vsub.s32 0, %v879
    %v881 = vrot.slane %v777, %v880
    %v882 = vlaneseq
    %v883 = vshrl.u32 %v882, 7
    %v884 = vsub.s32 1, %v883
    %v885 = vrot.slane %v777, %v884
    %v886 = vlaneseq
    %v887 = vshrl.u32 %v886, 7
    %v888 = vsub.s32 2, %v887
    %v889 = vrot.slane %v777, %v888
    %v890 = vlaneseq
    %v891 = vshrl.u32 %v890, 7
    %v892 = vsub.s32 3, %v891
    %v893 = vrot.slane %v777, %v892
    %v894 = vlaneseq
    %v895 = vshrl.u32 %v894, 7
    %v896 = vsub.s32 4, %v895
    %v897 = vrot.slane %v777, %v896
    %v898 = vlaneseq
    %v899 = vshrl.u32 %v898, 7
    %v900 = vsub.s32 5, %v899
    %v901 = vrot.slane %v777, %v900
    %v902 = vlaneseq
    %v903 = vshrl.u32 %v902, 7
    %v904 = vsub.s32 6, %v903
    %v905 = vrot.slane %v777, %v904
    %v906 = vlaneseq
    %v907 = vshrl.u32 %v906, 7
    %v908 = vsub.s32 7, %v907
    %v909 = vrot.slane %v777, %v908
    %v942 = vsub.f32 %v501, %v785
    %v943 = vsub.f32 %v503, %v789
    %v944 = vsub.f32 %v505, %v793
    %v945 = vsub.f32 %v507, %v797
    %v946 = vsub.f32 %v509, %v801
    %v947 = vsub.f32 %v511, %v805
    %v948 = vsub.f32 %v513, %v809
    %v949 = vsub.f32 %v515, %v813
    %v950 = vsub.f32 %v517, %v817
    %v951 = vsub.f32 %v519, %v821
    %v952 = vsub.f32 %v521, %v825
    %v953 = vsub.f32 %v523, %v829
    %v954 = vsub.f32 %v525, %v833
    %v955 = vsub.f32 %v527, %v837
    %v956 = vsub.f32 %v529, %v841
    %v957 = vsub.f32 %v531, %v845
    %v958 = vsub.f32 %v533, %v849
    %v959 = vsub.f32 %v535, %v853
    %v960 = vsub.f32 %v537, %v857
    %v961 = vsub.f32 %v539, %v861
    %v962 = vsub.f32 %v541, %v865
    %v963 = vsub.f32 %v543, %v869
    %v964 = vsub.f32 %v545, %v873
    %v965 = vsub.f32 %v547, %v877
    %v966 = vsub.f32 %v549, %v881
    %v967 = vsub.f32 %v551, %v885
    %v968 = vsub.f32 %v553, %v889
    %v969 = vsub.f32 %v555, %v893
    %v970 = vsub.f32 %v557, %v897
    %v971 = vsub.f32 %v559, %v901
    %v972 = vsub.f32 %v561, %v905
    %v973 = vsub.f32 %v563, %v909
    %v974 = vmul.f32 %v942, 1.442695
    %v975 = vpow.pop %v974
    %v976 = vmul.f32 %v943, 1.442695
    %v977 = vpow.pop %v976
    %v978 = vmul.f32 %v944, 1.442695
    %v979 = vpow.pop %v978
    %v980 = vmul.f32 %v945, 1.442695
    %v981 = vpow.pop %v980
    %v982 = vmul.f32 %v946, 1.442695
    %v983 = vpow.pop %v982
    %v984 = vmul.f32 %v947, 1.442695
    %v985 = vpow.pop %v984
    %v986 = vmul.f32 %v948, 1.442695
    %v987 = vpow.pop %v986
    %v988 = vmul.f32 %v949, 1.442695
    %v989 = vpow.pop %v988
    %v990 = vmul.f32 %v950, 1.442695
    %v991 = vpow.pop %v990
    %v992 = vmul.f32 %v951, 1.442695
    %v993 = vpow.pop %v992
    %v994 = vmul.f32 %v952, 1.442695
    %v995 = vpow.pop %v994
    %v996 = vmul.f32 %v953, 1.442695
    %v997 = vpow.pop %v996
    %v998 = vmul.f32 %v954, 1.442695
    %v999 = vpow.pop %v998
    %v1000 = vmul.f32 %v955, 1.442695
    %v1001 = vpow.pop %v1000
    %v1002 = vmul.f32 %v956, 1.442695
    %v1003 = vpow.pop %v1002
    %v1004 = vmul.f32 %v957, 1.442695
    %v1005 = vpow.pop %v1004
    %v1006 = vmul.f32 %v958, 1.442695
    %v1007 = vpow.pop %v1006
    %v1008 = vmul.f32 %v959, 1.442695
    %v1009 = vpow.pop %v1008
    %v1010 = vmul.f32 %v960, 1.442695
    %v1011 = vpow.pop %v1010
    %v1012 = vmul.f32 %v961, 1.442695
    %v1013 = vpow.pop %v1012
    %v1014 = vmul.f32 %v962, 1.442695
    %v1015 = vpow.pop %v1014
    %v1016 = vmul.f32 %v963, 1.442695
    %v1017 = vpow.pop %v1016
    %v1018 = vmul.f32 %v964, 1.442695
    %v1019 = vpow.pop %v1018
    %v1020 = vmul.f32 %v965, 1.442695
    %v1021 = vpow.pop %v1020
    %v1022 = vmul.f32 %v966, 1.442695
    %v1023 = vpow.pop %v1022
    %v1024 = vmul.f32 %v967, 1.442695
    %v1025 = vpow.pop %v1024
    %v1026 = vmul.f32 %v968, 1.442695
    %v1027 = vpow.pop %v1026
    %v1028 = vmul.f32 %v969, 1.442695
    %v1029 = vpow.pop %v1028
    %v1030 = vmul.f32 %v970, 1.442695
    %v1031 = vpow.pop %v1030
    %v1032 = vmul.f32 %v971, 1.442695
    %v1033 = vpow.pop %v1032
    %v1034 = vmul.f32 %v972, 1.442695
    %v1035 = vpow.pop %v1034
    %v1036 = vmul.f32 %v973, 1.442695
    %v1037 = vpow.pop %v1036
    %1070 = vset.pattern.permute.xlu0 0
    %1071 = vperm.xlu0 %1070, %v975
    %v1072 = vpop.permute.xlu0 %1071
    %1073 = vset.pattern.permute.xlu0 0
    %1074 = vperm.xlu0 %1073, %v977
    %v1075 = vpop.permute.xlu0 %1074
    %1076 = vset.pattern.permute.xlu0 0
    %1077 = vperm.xlu0 %1076, %v979
    %v1078 = vpop.permute.xlu0 %1077
    %1079 = vset.pattern.permute.xlu0 0
    %1080 = vperm.xlu0 %1079, %v981
    %v1081 = vpop.permute.xlu0 %1080
    %1082 = vset.pattern.permute.xlu0 0
    %1083 = vperm.xlu0 %1082, %v983
    %v1084 = vpop.permute.xlu0 %1083
    %1085 = vset.pattern.permute.xlu0 0
    %1086 = vperm.xlu0 %1085, %v985
    %v1087 = vpop.permute.xlu0 %1086
    %1088 = vset.pattern.permute.xlu0 0
    %1089 = vperm.xlu0 %1088, %v987
    %v1090 = vpop.permute.xlu0 %1089
    %1091 = vset.pattern.permute.xlu0 0
    %1092 = vperm.xlu0 %1091, %v989
    %v1093 = vpop.permute.xlu0 %1092
    %1094 = vset.pattern.permute.xlu0 0
    %1095 = vperm.xlu0 %1094, %v991
    %v1096 = vpop.permute.xlu0 %1095
    %1097 = vset.pattern.permute.xlu0 0
    %1098 = vperm.xlu0 %1097, %v993
    %v1099 = vpop.permute.xlu0 %1098
    %1100 = vset.pattern.permute.xlu0 0
    %1101 = vperm.xlu0 %1100, %v995
    %v1102 = vpop.permute.xlu0 %1101
    %1103 = vset.pattern.permute.xlu0 0
    %1104 = vperm.xlu0 %1103, %v997
    %v1105 = vpop.permute.xlu0 %1104
    %1106 = vset.pattern.permute.xlu0 0
    %1107 = vperm.xlu0 %1106, %v999
    %v1108 = vpop.permute.xlu0 %1107
    %1109 = vset.pattern.permute.xlu0 0
    %1110 = vperm.xlu0 %1109, %v1001
    %v1111 = vpop.permute.xlu0 %1110
    %1112 = vset.pattern.permute.xlu0 0
    %1113 = vperm.xlu0 %1112, %v1003
    %v1114 = vpop.permute.xlu0 %1113
    %1115 = vset.pattern.permute.xlu0 0
    %1116 = vperm.xlu0 %1115, %v1005
    %v1117 = vpop.permute.xlu0 %1116
    %1118 = vset.pattern.permute.xlu0 0
    %1119 = vperm.xlu0 %1118, %v1007
    %v1120 = vpop.permute.xlu0 %1119
    %1121 = vset.pattern.permute.xlu0 0
    %1122 = vperm.xlu0 %1121, %v1009
    %v1123 = vpop.permute.xlu0 %1122
    %1124 = vset.pattern.permute.xlu0 0
    %1125 = vperm.xlu0 %1124, %v1011
    %v1126 = vpop.permute.xlu0 %1125
    %1127 = vset.pattern.permute.xlu0 0
    %1128 = vperm.xlu0 %1127, %v1013
    %v1129 = vpop.permute.xlu0 %1128
    %1130 = vset.pattern.permute.xlu0 0
    %1131 = vperm.xlu0 %1130, %v1015
    %v1132 = vpop.permute.xlu0 %1131
    %1133 = vset.pattern.permute.xlu0 0
    %1134 = vperm.xlu0 %1133, %v1017
    %v1135 = vpop.permute.xlu0 %1134
    %1136 = vset.pattern.permute.xlu0 0
    %1137 = vperm.xlu0 %1136, %v1019
    %v1138 = vpop.permute.xlu0 %1137
    %1139 = vset.pattern.permute.xlu0 0
    %1140 = vperm.xlu0 %1139, %v1021
    %v1141 = vpop.permute.xlu0 %1140
    %1142 = vset.pattern.permute.xlu0 0
    %1143 = vperm.xlu0 %1142, %v1023
    %v1144 = vpop.permute.xlu0 %1143
    %1145 = vset.pattern.permute.xlu0 0
    %1146 = vperm.xlu0 %1145, %v1025
    %v1147 = vpop.permute.xlu0 %1146
    %1148 = vset.pattern.permute.xlu0 0
    %1149 = vperm.xlu0 %1148, %v1027
    %v1150 = vpop.permute.xlu0 %1149
    %1151 = vset.pattern.permute.xlu0 0
    %1152 = vperm.xlu0 %1151, %v1029
    %v1153 = vpop.permute.xlu0 %1152
    %1154 = vset.pattern.permute.xlu0 0
    %1155 = vperm.xlu0 %1154, %v1031
    %v1156 = vpop.permute.xlu0 %1155
    %1157 = vset.pattern.permute.xlu0 0
    %1158 = vperm.xlu0 %1157, %v1033
    %v1159 = vpop.permute.xlu0 %1158
    %1160 = vset.pattern.permute.xlu0 0
    %1161 = vperm.xlu0 %1160, %v1035
    %v1162 = vpop.permute.xlu0 %1161
    %1163 = vset.pattern.permute.xlu0 0
    %1164 = vperm.xlu0 %1163, %v1037
    %v1165 = vpop.permute.xlu0 %1164
    %v1166 = vlaneseq
    %v1167 = vshrl.u32 %v1166, 7
    %v1168 = vsub.s32 %v597, %v1167
    %v1169 = vrot.slane %v1072, %v1168
    %v1170 = vlaneseq
    %v1171 = vshrl.u32 %v1170, 7
    %v1172 = vsub.s32 %v597, %v1171
    %v1173 = vrot.slane %v1075, %v1172
    %v1174 = vlaneseq
    %v1175 = vshrl.u32 %v1174, 7
    %v1176 = vsub.s32 %v597, %v1175
    %v1177 = vrot.slane %v1078, %v1176
    %v1178 = vlaneseq
    %v1179 = vshrl.u32 %v1178, 7
    %v1180 = vsub.s32 %v597, %v1179
    %v1181 = vrot.slane %v1081, %v1180
    %v1182 = vlaneseq
    %v1183 = vshrl.u32 %v1182, 7
    %v1184 = vsub.s32 %v597, %v1183
    %v1185 = vrot.slane %v1084, %v1184
    %v1186 = vlaneseq
    %v1187 = vshrl.u32 %v1186, 7
    %v1188 = vsub.s32 %v597, %v1187
    %v1189 = vrot.slane %v1087, %v1188
    %v1190 = vlaneseq
    %v1191 = vshrl.u32 %v1190, 7
    %v1192 = vsub.s32 %v597, %v1191
    %v1193 = vrot.slane %v1090, %v1192
    %v1194 = vlaneseq
    %v1195 = vshrl.u32 %v1194, 7
    %v1196 = vsub.s32 %v597, %v1195
    %v1197 = vrot.slane %v1093, %v1196
    %v1198 = vlaneseq
    %v1199 = vshrl.u32 %v1198, 7
    %v1200 = vsub.s32 %v597, %v1199
    %v1201 = vrot.slane %v1096, %v1200
    %v1202 = vlaneseq
    %v1203 = vshrl.u32 %v1202, 7
    %v1204 = vsub.s32 %v597, %v1203
    %v1205 = vrot.slane %v1099, %v1204
    %v1206 = vlaneseq
    %v1207 = vshrl.u32 %v1206, 7
    %v1208 = vsub.s32 %v597, %v1207
    %v1209 = vrot.slane %v1102, %v1208
    %v1210 = vlaneseq
    %v1211 = vshrl.u32 %v1210, 7
    %v1212 = vsub.s32 %v597, %v1211
    %v1213 = vrot.slane %v1105, %v1212
    %v1214 = vlaneseq
    %v1215 = vshrl.u32 %v1214, 7
    %v1216 = vsub.s32 %v597, %v1215
    %v1217 = vrot.slane %v1108, %v1216
    %v1218 = vlaneseq
    %v1219 = vshrl.u32 %v1218, 7
    %v1220 = vsub.s32 %v597, %v1219
    %v1221 = vrot.slane %v1111, %v1220
    %v1222 = vlaneseq
    %v1223 = vshrl.u32 %v1222, 7
    %v1224 = vsub.s32 %v597, %v1223
    %v1225 = vrot.slane %v1114, %v1224
    %v1226 = vlaneseq
    %v1227 = vshrl.u32 %v1226, 7
    %v1228 = vsub.s32 %v597, %v1227
    %v1229 = vrot.slane %v1117, %v1228
    %v1230 = vlaneseq
    %v1231 = vshrl.u32 %v1230, 7
    %v1232 = vsub.s32 %v597, %v1231
    %v1233 = vrot.slane %v1120, %v1232
    %v1234 = vlaneseq
    %v1235 = vshrl.u32 %v1234, 7
    %v1236 = vsub.s32 %v597, %v1235
    %v1237 = vrot.slane %v1123, %v1236
    %v1238 = vlaneseq
    %v1239 = vshrl.u32 %v1238, 7
    %v1240 = vsub.s32 %v597, %v1239
    %v1241 = vrot.slane %v1126, %v1240
    %v1242 = vlaneseq
    %v1243 = vshrl.u32 %v1242, 7
    %v1244 = vsub.s32 %v597, %v1243
    %v1245 = vrot.slane %v1129, %v1244
    %v1246 = vlaneseq
    %v1247 = vshrl.u32 %v1246, 7
    %v1248 = vsub.s32 %v597, %v1247
    %v1249 = vrot.slane %v1132, %v1248
    %v1250 = vlaneseq
    %v1251 = vshrl.u32 %v1250, 7
    %v1252 = vsub.s32 %v597, %v1251
    %v1253 = vrot.slane %v1135, %v1252
    %v1254 = vlaneseq
    %v1255 = vshrl.u32 %v1254, 7
    %v1256 = vsub.s32 %v597, %v1255
    %v1257 = vrot.slane %v1138, %v1256
    %v1258 = vlaneseq
    %v1259 = vshrl.u32 %v1258, 7
    %v1260 = vsub.s32 %v597, %v1259
    %v1261 = vrot.slane %v1141, %v1260
    %v1262 = vlaneseq
    %v1263 = vshrl.u32 %v1262, 7
    %v1264 = vsub.s32 %v597, %v1263
    %v1265 = vrot.slane %v1144, %v1264
    %v1266 = vlaneseq
    %v1267 = vshrl.u32 %v1266, 7
    %v1268 = vsub.s32 %v597, %v1267
    %v1269 = vrot.slane %v1147, %v1268
    %v1270 = vlaneseq
    %v1271 = vshrl.u32 %v1270, 7
    %v1272 = vsub.s32 %v597, %v1271
    %v1273 = vrot.slane %v1150, %v1272
    %v1274 = vlaneseq
    %v1275 = vshrl.u32 %v1274, 7
    %v1276 = vsub.s32 %v597, %v1275
    %v1277 = vrot.slane %v1153, %v1276
    %v1278 = vlaneseq
    %v1279 = vshrl.u32 %v1278, 7
    %v1280 = vsub.s32 %v597, %v1279
    %v1281 = vrot.slane %v1156, %v1280
    %v1282 = vlaneseq
    %v1283 = vshrl.u32 %v1282, 7
    %v1284 = vsub.s32 %v597, %v1283
    %v1285 = vrot.slane %v1159, %v1284
    %v1286 = vlaneseq
    %v1287 = vshrl.u32 %v1286, 7
    %v1288 = vsub.s32 %v597, %v1287
    %v1289 = vrot.slane %v1162, %v1288
    %v1290 = vlaneseq
    %v1291 = vshrl.u32 %v1290, 7
    %v1292 = vsub.s32 %v597, %v1291
    %v1293 = vrot.slane %v1165, %v1292
    %v1294 = vsel %vm726, %v1173, %v1169
    %v1295 = vsel %vm728, %v1177, %v1294
    %v1296 = vsel %vm730, %v1181, %v1295
    %v1297 = vsel %vm732, %v1185, %v1296
    %v1298 = vsel %vm734, %v1189, %v1297
    %v1299 = vsel %vm736, %v1193, %v1298
    %v1300 = vsel %vm738, %v1197, %v1299
    %v1301 = vsel %vm726, %v1205, %v1201
    %v1302 = vsel %vm728, %v1209, %v1301
    %v1303 = vsel %vm730, %v1213, %v1302
    %v1304 = vsel %vm732, %v1217, %v1303
    %v1305 = vsel %vm734, %v1221, %v1304
    %v1306 = vsel %vm736, %v1225, %v1305
    %v1307 = vsel %vm738, %v1229, %v1306
    %v1308 = vsel %vm726, %v1237, %v1233
    %v1309 = vsel %vm728, %v1241, %v1308
    %v1310 = vsel %vm730, %v1245, %v1309
    %v1311 = vsel %vm732, %v1249, %v1310
    %v1312 = vsel %vm734, %v1253, %v1311
    %v1313 = vsel %vm736, %v1257, %v1312
    %v1314 = vsel %vm738, %v1261, %v1313
    %v1315 = vsel %vm726, %v1269, %v1265
    %v1316 = vsel %vm728, %v1273, %v1315
    %v1317 = vsel %vm730, %v1277, %v1316
    %v1318 = vsel %vm732, %v1281, %v1317
    %v1319 = vsel %vm734, %v1285, %v1318
    %v1320 = vsel %vm736, %v1289, %v1319
    %v1321 = vsel %vm738, %v1293, %v1320
    %v1326 = vsel %vm765, %v1300, 0.0
    %1327 = vadd.xlane.f32.xlu0 %v1326
    %v1328 = vpop.xlane.xlu0 %1327
    %v1329 = vsel %vm765, %v1307, 0.0
    %1330 = vadd.xlane.f32.xlu0 %v1329
    %v1331 = vpop.xlane.xlu0 %1330
    %v1332 = vsel %vm765, %v1314, 0.0
    %1333 = vadd.xlane.f32.xlu0 %v1332
    %v1334 = vpop.xlane.xlu0 %1333
    %v1335 = vsel %vm765, %v1321, 0.0
    %1336 = vadd.xlane.f32.xlu0 %v1335
    %v1337 = vpop.xlane.xlu0 %1336
    %v1338 = vlog2.pop %v1328
    %v1339 = vmul.f32 %v1338, 0.6931472
    %v1340 = vlog2.pop %v1331
    %v1341 = vmul.f32 %v1340, 0.6931472
    %v1342 = vlog2.pop %v1334
    %v1343 = vmul.f32 %v1342, 0.6931472
    %v1344 = vlog2.pop %v1337
    %v1345 = vmul.f32 %v1344, 0.6931472
    %v1346 = vadd.f32 %v768, %v1339
    %v1347 = vadd.f32 %v771, %v1341
    %v1348 = vadd.f32 %v774, %v1343
    %v1349 = vadd.f32 %v777, %v1345
    %v1350 = vsub.f32 %v101, %v1346
    %v1351 = vsub.f32 %v103, %v1347
    %v1352 = vsub.f32 %v105, %v1348
    %v1353 = vsub.f32 %v107, %v1349
    %v1358 = vlaneseq
    %v1359 = vshrl.u32 %v1358, 7
    %v1360 = vsub.s32 %v597, %v1359
    %v1361 = vrot.slane %v1350, %v1360
    %v1362 = vadd.s32 %v597, 4294967288
    %v1363 = vlaneseq
    %v1364 = vshrl.u32 %v1363, 7
    %v1365 = vsub.s32 %v1362, %v1364
    %v1366 = vrot.slane %v1351, %v1365
    %vm1367 = vcmask 130112
    %v1368 = vsel %vm1367, %v1366, %v1361
    %v1369 = vadd.s32 %v597, 4294967280
    %v1370 = vlaneseq
    %v1371 = vshrl.u32 %v1370, 7
    %v1372 = vsub.s32 %v1369, %v1371
    %v1373 = vrot.slane %v1352, %v1372
    %vm1374 = vcmask 195712
    %v1375 = vsel %vm1374, %v1373, %v1368
    %v1376 = vadd.s32 %v597, 4294967272
    %v1377 = vlaneseq
    %v1378 = vshrl.u32 %v1377, 7
    %v1379 = vsub.s32 %v1376, %v1378
    %v1380 = vrot.slane %v1353, %v1379
    %vm1381 = vcmask 261312
    %v1382 = vsel %vm1381, %v1380, %v1375
    %vm1384 = vcmask 253952
    %1385 = vst.msk [vmem:[#allocation8] sm:$0x1] %vm1384, %v1382
    // Predicated region
    $region26: #{tpu_custom_call.1} parent=1 // pred_check
      _
    $region27: #{tpu_custom_call.1} parent=1 // pred_check_branch
      %1387 = sbr.rel (0) target = $region29
    $region28: #{tpu_custom_call.1} parent=1 // pred_region
      %s1389 = ssub.s32 16, 16
      %1390 = vsyncadd [#allocation4], %s1389
      %s1392 = sshll.u32 [#allocation8], 4
      %s1393 = int_to_ptr.vmem [resolvable:$true] %s1392
      %1395 = dma.vmem_to_hbm [thread:$0]  %s1393, 16, %s3, [#allocation4]
    $region29: #{tpu_custom_call.1} parent=1 // pred_fallthru
      _
    // Predicated region
    $region30: #{tpu_custom_call.1} parent=1 // pred_check
      _
    $region31: #{tpu_custom_call.1} parent=1 // pred_check_branch
      %1397 = sbr.rel (0) target = $region33
    $region32: #{tpu_custom_call.1} parent=1 // pred_region
      %1398 = dma.done [#allocation4], 16
    $region33: #{tpu_custom_call.1} parent=1 // pred_fallthru
      _
    %1399 = vsyncpa [#allocation3], 1
    %1400 = vsyncpa [#allocation6], 1
    %1401 = vsyncpa [#allocation4], 1

</llo_original>
